<compile_context>
chip_gen: v7x
topology: tpu7x:2x2x1
jax: 0.10.0
libtpu: 0.0.40
codegen_flags: <defaults>
</compile_context>

<pallas_src>
import jax
import jax.numpy as jnp
from jax.experimental import pallas as pl
from jax.experimental.pallas import tpu as pltpu  # noqa: F401  (TPU backend)


# ---------------------------------------------------------------------------
# Fused Pallas kernel: 2-layer GCN encode + dot-product decode
# ---------------------------------------------------------------------------

def _fused_gcn_decode_kernel(a_ref, x_ref, w1_ref, b1_ref, w2_ref, b2_ref,
                             idx_ref, o_ref):
    """Fused forward.

    Layer 1: H = relu((A @ X) @ W1 + b1)   (aggregate first: f_in < hidden)
    Layer 2: Z = A @ (H @ W2) + b2         (transform first: f_out < hidden)
    Decode : logits[e] = sum_d Z[src[e], d] * Z[dst[e], d]
             (src/dst gathered with a single one-hot selection matmul)
    """
    a = a_ref[...]                                             # (Np, Np) f32

    # ---- layer 1: (A @ X) @ W1 + b1, ReLU --------------------------------
    ax = jnp.dot(a, x_ref[...], preferred_element_type=jnp.float32)
    h = jnp.dot(ax, w1_ref[...], preferred_element_type=jnp.float32)
    h = jnp.maximum(h + b1_ref[...], 0.0)                      # (Np, H)

    # ---- layer 2: A @ (H @ W2) + b2 --------------------------------------
    hw = jnp.dot(h, w2_ref[...], preferred_element_type=jnp.float32)
    z = jnp.dot(a, hw, preferred_element_type=jnp.float32) + b2_ref[...]  # (Np, D)

    # ---- decode: single in-kernel gather via one one-hot matmul -----------
    e2 = idx_ref.shape[0]            # 2 * E_pad (src rows then dst rows)
    e_pad = e2 // 2
    n_pad = a.shape[0]
    col_ids = jax.lax.broadcasted_iota(jnp.int32, (e2, n_pad), 1)
    one_hot = (col_ids == idx_ref[...]).astype(jnp.float32)    # (2E, Np)
    zz = jnp.dot(one_hot, z, preferred_element_type=jnp.float32)  # (2E, D)
    # E_pad is a multiple of 128 -> sublane-aligned static slices, no relayout.
    prod = zz[:e_pad, :] * zz[e_pad:, :]                       # (E, D)

    # Row-sum via a (1,D)x(E,D)^T matmul so the result lands lane-dense as
    # (1, E) with one unmasked vector store (no (E,1) masked partial stores).
    ones_row = jnp.ones((1, prod.shape[1]), jnp.float32)
    logits = jax.lax.dot_general(
        ones_row, prod, (((1,), (1,)), ((), ())),
        preferred_element_type=jnp.float32)                    # (1, E)
    o_ref[...] = logits.astype(o_ref.dtype)


# ---------------------------------------------------------------------------
# Glue: GCN normalization + full model forward (all inside one jit region)
# ---------------------------------------------------------------------------

def _round_up(v, m):
    return (v + m - 1) // m * m


def build_normalized_adj(edge_index, num_nodes):
    """Dense GCN-normalized adjacency, matching PyG GCNConv's gcn_norm.

    Directed message passing (src -> dst), duplicate edges accumulated,
    add_remaining_self_loops (existing self-loops keep their weight; only
    nodes without one get a unit self-loop), D^{-1/2} A D^{-1/2} with D the
    in-degree (row sums of A including self-loops).
    """
    src, dst = edge_index[0], edge_index[1]
    a = jnp.zeros((num_nodes, num_nodes), jnp.float32)
    a = a.at[dst, src].add(1.0)                     # duplicates accumulate
    diag = jnp.diagonal(a)
    a = a + jnp.diag(jnp.where(diag > 0.0, 0.0, 1.0))   # remaining self loops
    deg = jnp.sum(a, axis=1)
    d_inv_sqrt = jnp.where(deg > 0, jax.lax.rsqrt(deg), 0.0)
    return d_inv_sqrt[:, None] * a * d_inv_sqrt[None, :]


def _model_forward_impl(x, edge_index, edge_label_index, params):
    """Equivalent of Model.forward: returns flattened logits (E_label,)."""
    assert len(params) == 2, "fused kernel implements the 2-layer GCN config"
    (w1, b1), (w2, b2) = params
    n, f_in = x.shape
    hidden = w1.shape[1]
    f_out = w2.shape[1]
    e = edge_label_index.shape[1]

    a_norm = build_normalized_adj(edge_index, n)

    # Pad node count only to a sublane multiple (whole-array blocks are exempt
    # from the (8,128) rule); pad edge count to a multiple of 128 so the
    # logits store is lane-dense. Padded A rows/cols and X rows are zero, so
    # real-node outputs are unaffected. NOTE: with nonzero biases the padded
    # node rows carry H=relu(b1)/Z=b2 junk, and padded edge slots gather node
    # 0 -- both are discarded by the [:e] slice; do not consume padded output.
    n_pad = max(_round_up(n, 8), 8)
    e_pad = max(_round_up(e, 128), 128)

    a_p = jnp.zeros((n_pad, n_pad), jnp.float32).at[:n, :n].set(a_norm)
    x_p = jnp.zeros((n_pad, f_in), jnp.float32).at[:n, :].set(x)
    # src indices in rows [0, e_pad), dst indices in rows [e_pad, 2*e_pad).
    idx = jnp.zeros((2 * e_pad, 1), jnp.int32)
    idx = idx.at[:e, 0].set(edge_label_index[0])
    idx = idx.at[e_pad:e_pad + e, 0].set(edge_label_index[1])

    logits_pad = pl.pallas_call(
        _fused_gcn_decode_kernel,
        out_shape=jax.ShapeDtypeStruct((1, e_pad), jnp.float32),
    )(a_p, x_p,
      w1, b1.reshape(1, hidden),
      w2, b2.reshape(1, f_out),
      idx)

    return logits_pad[0, :e]


# One jit region: adjacency build, padding, kernel and final slice fuse into a
# single XLA execution (dispatch overhead otherwise dominates at this size).
model_forward = jax.jit(_model_forward_impl)


# ---------------------------------------------------------------------------
# Main
# ---------------------------------------------------------------------------

if __name__ == "__main__":
    key = jax.random.PRNGKey(0)

    # configs: nfeat=32, hidden=128, out=64, num_gnn_layers=2, gnn_model='GCN'
    NFEAT, HIDDEN, OUT = 32, 128, 64
    N_NODES = 16
    N_EDGES = 24
    N_LABEL_EDGES = 8

    k_x, k_e, k_el, k_w1, k_w2 = jax.random.split(key, 5)

    x = jax.random.normal(k_x, (N_NODES, NFEAT), jnp.float32)
    edge_index = jax.random.randint(k_e, (2, N_EDGES), 0, N_NODES, jnp.int32)
    edge_label_index = jax.random.randint(
        k_el, (2, N_LABEL_EDGES), 0, N_NODES, jnp.int32)

    # Deterministic parameter init (Glorot-ish scaling), biases at zero.
    w1 = jax.random.normal(k_w1, (NFEAT, HIDDEN), jnp.float32) / jnp.sqrt(NFEAT)
    b1 = jnp.zeros((HIDDEN,), jnp.float32)
    w2 = jax.random.normal(k_w2, (HIDDEN, OUT), jnp.float32) / jnp.sqrt(HIDDEN)
    b2 = jnp.zeros((OUT,), jnp.float32)
    params = [(w1, b1), (w2, b2)]

    out = model_forward(x, edge_index, edge_label_index, params)
    out = jax.block_until_ready(out)

    # Pure-JAX reference check (matches the PyTorch GCNConv math).
    a_ref = build_normalized_adj(edge_index, N_NODES)
    h_ref = jnp.maximum(a_ref @ (x @ w1) + b1, 0.0)
    z_ref = a_ref @ (h_ref @ w2) + b2
    logits_ref = jnp.sum(
        z_ref[edge_label_index[0]] * z_ref[edge_label_index[1]], axis=-1)
    assert out.shape == (N_LABEL_EDGES,)
    assert jnp.allclose(out, logits_ref, atol=1e-4, rtol=1e-4)

    print("KERNEL_OK")
</pallas_src>

<mosaic_0001>
module attributes {stable_mosaic.version = 11 : i64} {
  func.func @_fused_gcn_decode_kernel(%arg0: memref<16x16xf32, #tpu.memory_space<vmem>>, %arg1: memref<16x32xf32, #tpu.memory_space<vmem>>, %arg2: memref<32x128xf32, #tpu.memory_space<vmem>>, %arg3: memref<1x128xf32, #tpu.memory_space<vmem>>, %arg4: memref<128x64xf32, #tpu.memory_space<vmem>>, %arg5: memref<1x64xf32, #tpu.memory_space<vmem>>, %arg6: memref<256x1xi32, #tpu.memory_space<vmem>>, %arg7: memref<1x128xf32, #tpu.memory_space<vmem>>) attributes {dimension_semantics = [], scalar_prefetch = 0 : i64, scratch_operands = 0 : i64, tpu.core_type = #tpu.core_type<tc>} {
    %c0 = arith.constant 0 : index
    %c0_0 = arith.constant 0 : index
    %0 = vector.load %arg0[%c0, %c0_0] : memref<16x16xf32, #tpu.memory_space<vmem>>, vector<16x16xf32>
    %c0_1 = arith.constant 0 : index
    %c0_2 = arith.constant 0 : index
    %1 = vector.load %arg1[%c0_1, %c0_2] : memref<16x32xf32, #tpu.memory_space<vmem>>, vector<16x32xf32>
    %cst = arith.constant dense<0.000000e+00> : vector<16x32xf32>
    %2 = tpu.matmul %0, %1, %cst {dimension_numbers = #tpu.dot_dimension_numbers<[1], [0], [0], [1], [0, 0, 1, 1], [], []>} : vector<16x16xf32>, vector<16x32xf32>, vector<16x32xf32> -> vector<16x32xf32>
    %c0_3 = arith.constant 0 : index
    %c0_4 = arith.constant 0 : index
    %3 = vector.load %arg2[%c0_3, %c0_4] : memref<32x128xf32, #tpu.memory_space<vmem>>, vector<32x128xf32>
    %cst_5 = arith.constant dense<0.000000e+00> : vector<16x128xf32>
    %4 = tpu.matmul %2, %3, %cst_5 {dimension_numbers = #tpu.dot_dimension_numbers<[1], [0], [0], [1], [0, 0, 1, 1], [], []>} : vector<16x32xf32>, vector<32x128xf32>, vector<16x128xf32> -> vector<16x128xf32>
    %c0_6 = arith.constant 0 : index
    %c0_7 = arith.constant 0 : index
    %5 = vector.load %arg3[%c0_6, %c0_7] : memref<1x128xf32, #tpu.memory_space<vmem>>, vector<1x128xf32>
    %6 = vector.broadcast %5 : vector<1x128xf32> to vector<16x128xf32>
    %7 = arith.addf %4, %6 : vector<16x128xf32>
    %cst_8 = arith.constant 0.000000e+00 : f32
    %8 = vector.broadcast %cst_8 : f32 to vector<16x128xf32>
    %9 = arith.maximumf %7, %8 : vector<16x128xf32>
    %c0_9 = arith.constant 0 : index
    %c0_10 = arith.constant 0 : index
    %10 = vector.load %arg4[%c0_9, %c0_10] : memref<128x64xf32, #tpu.memory_space<vmem>>, vector<128x64xf32>
    %cst_11 = arith.constant dense<0.000000e+00> : vector<16x64xf32>
    %11 = tpu.matmul %9, %10, %cst_11 {dimension_numbers = #tpu.dot_dimension_numbers<[1], [0], [0], [1], [0, 0, 1, 1], [], []>} : vector<16x128xf32>, vector<128x64xf32>, vector<16x64xf32> -> vector<16x64xf32>
    %cst_12 = arith.constant dense<0.000000e+00> : vector<16x64xf32>
    %12 = tpu.matmul %0, %11, %cst_12 {dimension_numbers = #tpu.dot_dimension_numbers<[1], [0], [0], [1], [0, 0, 1, 1], [], []>} : vector<16x16xf32>, vector<16x64xf32>, vector<16x64xf32> -> vector<16x64xf32>
    %c0_13 = arith.constant 0 : index
    %c0_14 = arith.constant 0 : index
    %13 = vector.load %arg5[%c0_13, %c0_14] : memref<1x64xf32, #tpu.memory_space<vmem>>, vector<1x64xf32>
    %14 = vector.broadcast %13 : vector<1x64xf32> to vector<16x64xf32>
    %15 = arith.addf %12, %14 : vector<16x64xf32>
    %16 = tpu.iota {dimensions = array<i32: 1>} : vector<256x16xi32>
    %c0_15 = arith.constant 0 : index
    %c0_16 = arith.constant 0 : index
    %17 = vector.load %arg6[%c0_15, %c0_16] : memref<256x1xi32, #tpu.memory_space<vmem>>, vector<256x1xi32>
    %18 = vector.broadcast %17 : vector<256x1xi32> to vector<256x16xi32>
    %19 = arith.cmpi eq, %16, %18 : vector<256x16xi32>
    %20 = arith.extui %19 : vector<256x16xi1> to vector<256x16xi32>
    %21 = arith.sitofp %20 : vector<256x16xi32> to vector<256x16xf32>
    %cst_17 = arith.constant dense<0.000000e+00> : vector<256x64xf32>
    %22 = tpu.matmul %21, %15, %cst_17 {dimension_numbers = #tpu.dot_dimension_numbers<[1], [0], [0], [1], [0, 0, 1, 1], [], []>} : vector<256x16xf32>, vector<16x64xf32>, vector<256x64xf32> -> vector<256x64xf32>
    %23 = vector.extract_strided_slice %22 {offsets = [0, 0], sizes = [128, 64], strides = [1, 1]} : vector<256x64xf32> to vector<128x64xf32>
    %24 = vector.extract_strided_slice %22 {offsets = [128, 0], sizes = [128, 64], strides = [1, 1]} : vector<256x64xf32> to vector<128x64xf32>
    %25 = arith.mulf %23, %24 : vector<128x64xf32>
    %cst_18 = arith.constant 1.000000e+00 : f32
    %26 = vector.broadcast %cst_18 : f32 to vector<1x64xf32>
    %cst_19 = arith.constant dense<0.000000e+00> : vector<1x128xf32>
    %27 = tpu.matmul %26, %25, %cst_19 {dimension_numbers = #tpu.dot_dimension_numbers<[1], [1], [0], [0], [0, 0, 1, 0], [], []>} : vector<1x64xf32>, vector<128x64xf32>, vector<1x128xf32> -> vector<1x128xf32>
    %c0_20 = arith.constant 0 : index
    %c0_21 = arith.constant 0 : index
    %28 = vector.load %arg7[%c0_20, %c0_21] : memref<1x128xf32, #tpu.memory_space<vmem>>, vector<1x128xf32>
    tpu.vector_store %arg7[%c0_20, %c0_21], %27 {strides = array<i32>} : memref<1x128xf32, #tpu.memory_space<vmem>>, vector<1x128xf32>,
    return
  }
}

</mosaic_0001>

<llo_original>
// kernel: _model_forward_impl.1
$region0: #{_model_forward_impl.1}
  #allocation0 [shape = 'u32[]', space=smem, size = 0x4, offset = 0x4, fixed_abs, tag = 'smem constant byte address 0x4 - core index']
  #allocation1 [shape = 'u32[144,128]{1,0:T(1,128)}', space=vmem, size = 0x12000, scoped, tag = 'internal scratch']
  %s0 = inlined_call_operand.vmem [shape: f32[16,16], index: 0, kind: input, shape index: {}]
  %s1 = inlined_call_operand.vmem [shape: f32[16,32], index: 1, kind: input, shape index: {}]
  %s2 = inlined_call_operand.vmem [shape: f32[32,128], index: 2, kind: input, shape index: {}]
  %s3 = inlined_call_operand.vmem [shape: f32[1,128], index: 3, kind: input, shape index: {}]
  %s4 = inlined_call_operand.vmem [shape: f32[128,64], index: 4, kind: input, shape index: {}]
  %s5 = inlined_call_operand.vmem [shape: f32[1,64], index: 5, kind: input, shape index: {}]
  %s6 = inlined_call_operand.vmem [shape: s32[256,1], index: 6, kind: input, shape index: {}]
  %s7 = inlined_call_operand.vmem [shape: f32[1,128], index: 7, kind: output, shape index: {}]
  %s8 = sld [smem:[#allocation0]]
  $region38: #{_model_forward_impl.1} parent=0
    _
  %s10 = ssub.s32 1, %s8
  %s11 = scalar_select 0, %s10, %s8
  // Predicated region
  $region2: #{_model_forward_impl.1} parent=0 // pred_check
    _
  $region3: #{_model_forward_impl.1} parent=0 // pred_check_branch
    %13 = sbr.rel (0) target = $region5
  $region4: #{_model_forward_impl.1} parent=0 // pred_region
    _
  $region5: #{_model_forward_impl.1} parent=0 // pred_fallthru
    _
  // Predicated region
  $region6: #{_model_forward_impl.1} parent=0 // pred_check
    _
  $region7: #{_model_forward_impl.1} parent=0 // pred_check_branch
    %15 = sbr.rel (0) target = $region9
  $region8: #{_model_forward_impl.1} parent=0 // pred_region
    _
  $region9: #{_model_forward_impl.1} parent=0 // pred_fallthru
    _
  // Predicated region
  $region10: #{_model_forward_impl.1} parent=0 // pred_check
    _
  $region11: #{_model_forward_impl.1} parent=0 // pred_check_branch
    %17 = sbr.rel (0) target = $region13
  $region12: #{_model_forward_impl.1} parent=0 // pred_region
    _
  $region13: #{_model_forward_impl.1} parent=0 // pred_fallthru
    _
  // Predicated region
  $region14: #{_model_forward_impl.1} parent=0 // pred_check
    _
  $region15: #{_model_forward_impl.1} parent=0 // pred_check_branch
    %19 = sbr.rel (0) target = $region17
  $region16: #{_model_forward_impl.1} parent=0 // pred_region
    _
  $region17: #{_model_forward_impl.1} parent=0 // pred_fallthru
    _
  // Predicated region
  $region18: #{_model_forward_impl.1} parent=0 // pred_check
    _
  $region19: #{_model_forward_impl.1} parent=0 // pred_check_branch
    %21 = sbr.rel (0) target = $region21
  $region20: #{_model_forward_impl.1} parent=0 // pred_region
    _
  $region21: #{_model_forward_impl.1} parent=0 // pred_fallthru
    _
  // Predicated region
  $region22: #{_model_forward_impl.1} parent=0 // pred_check
    _
  $region23: #{_model_forward_impl.1} parent=0 // pred_check_branch
    %23 = sbr.rel (0) target = $region25
  $region24: #{_model_forward_impl.1} parent=0 // pred_region
    _
  $region25: #{_model_forward_impl.1} parent=0 // pred_fallthru
    _
  // Predicated region
  $region26: #{_model_forward_impl.1} parent=0 // pred_check
    _
  $region27: #{_model_forward_impl.1} parent=0 // pred_check_branch
    %25 = sbr.rel (0) target = $region29
  $region28: #{_model_forward_impl.1} parent=0 // pred_region
    _
  $region29: #{_model_forward_impl.1} parent=0 // pred_fallthru
    _
  %v26 = vld [vmem:[%s0] sm:$0xff]
  %v27 = vld [vmem:[%s0 + $0x8] sm:$0xff]
  %v28 = vld [vmem:[%s1] sm:$0xff]
  %v29 = vld [vmem:[%s1 + $0x8] sm:$0xff]
  %vm30 = vcmask 130048
  %v32 = vsel %vm30, %v26, 0
  %v35 = vsel %vm30, %v27, 0
  %37 = vmatprep.subr.mxu0 0.0
  %38 = vmatpush1.msra.mxu0 %v28
  %39 = vmatprep.subr.mxu0 0.0
  %40 = vmatpush1.msra.mxu0 %v29
  %41 = vmatprep.subr.mxu0 0.0
  %42 = vmatpush1.msra.mxu0 0.0
  %43 = vmatprep.subr.mxu0 0.0
  %44 = vmatpush1.msra.mxu0 0.0
  %45 = vmatprep.subr.mxu0 0.0
  %46 = vmatpush1.msra.mxu0 0.0
  %47 = vmatprep.subr.mxu0 0.0
  %48 = vmatpush1.msra.mxu0 0.0
  %49 = vmatprep.subr.mxu0 0.0
  %50 = vmatpush1.msra.mxu0 0.0
  %51 = vmatprep.subr.mxu0 0.0
  %52 = vmatpush1.msra.mxu0 0.0
  %53 = vmatprep.subr.mxu0 0.0
  %54 = vmatpush1.msra.mxu0 0.0
  %55 = vmatprep.subr.mxu0 0.0
  %56 = vmatpush1.msra.mxu0 0.0
  %57 = vmatprep.subr.mxu0 0.0
  %58 = vmatpush1.msra.mxu0 0.0
  %59 = vmatprep.subr.mxu0 0.0
  %60 = vmatpush1.msra.mxu0 0.0
  %61 = vmatprep.subr.mxu0 0.0
  %62 = vmatpush1.msra.mxu0 0.0
  %63 = vmatprep.subr.mxu0 0.0
  %64 = vmatpush1.msra.mxu0 0.0
  %65 = vmatprep.subr.mxu0 0.0
  %66 = vmatpush1.msra.mxu0 0.0
  %67 = vmatprep.subr.mxu0 0.0
  %68 = vmatpush1.msra.mxu0 0.0
  %69 = vmatprep.subr.mxu0 0.0
  %70 = vmatpush1.msra.mxu0 0.0
  %71 = vmatprep.subr.mxu0 0.0
  %72 = vmatpush1.msra.mxu0 0.0
  %73 = vmatprep.subr.mxu0 0.0
  %74 = vmatpush1.msra.mxu0 0.0
  %75 = vmatprep.subr.mxu0 0.0
  %76 = vmatpush1.msra.mxu0 0.0
  %77 = vmatprep.subr.mxu0 0.0
  %78 = vmatpush1.msra.mxu0 0.0
  %79 = vmatprep.subr.mxu0 0.0
  %80 = vmatpush1.msra.mxu0 0.0
  %81 = vmatprep.subr.mxu0 0.0
  %82 = vmatpush1.msra.mxu0 0.0
  %83 = vmatprep.subr.mxu0 0.0
  %84 = vmatpush1.msra.mxu0 0.0
  %85 = vmatprep.subr.mxu0 0.0
  %86 = vmatpush1.msra.mxu0 0.0
  %87 = vmatprep.subr.mxu0 0.0
  %88 = vmatpush1.msra.mxu0 0.0
  %89 = vmatprep.subr.mxu0 0.0
  %90 = vmatpush1.msra.mxu0 0.0
  %91 = vmatprep.subr.mxu0 0.0
  %92 = vmatpush1.msra.mxu0 0.0
  %93 = vmatprep.subr.mxu0 0.0
  %94 = vmatpush1.msra.mxu0 0.0
  %95 = vmatprep.subr.mxu0 0.0
  %96 = vmatpush1.msra.mxu0 0.0
  %97 = vmatprep.subr.mxu0 0.0
  %98 = vmatpush1.msra.mxu0 0.0
  %99 = vmatprep.subr.mxu0 0.0
  %100 = vmatpush1.msra.mxu0 0.0
  %101 = vmatprep.mubr.f32.mxu0 0.0
  %102 = vmatmul.mubr.f32.gmra.mrb[0].mxu0 %v32
  %v103 = vpop.f32.mrb[0].mxu0
  %v104 = vadd.f32 0.0, %v103
  %v105 = vpop.f32.mrb[0].mxu0
  %106 = vmatprep.mubr.f32.mxu0 0.0
  %107 = vmatmul.mubr.f32.gmra.mrb[0].mxu0 %v35
  %v108 = vpop.f32.mrb[0].mxu0
  %v109 = vadd.f32 0.0, %v108
  %v110 = vpop.f32.mrb[0].mxu0
  %111 = vdwg.mxu0
  %v112 = vld [vmem:[%s2] sm:$0xff]
  %v113 = vld [vmem:[%s2 + $0x8] sm:$0xff]
  %v114 = vld [vmem:[%s2 + $0x10] sm:$0xff]
  %v115 = vld [vmem:[%s2 + $0x18] sm:$0xff]
  %v116 = vld [vmem:[%s3] sm:$0x1]
  %v118 = vlaneseq
  %v119 = vshrl.u32 %v118, 7
  %v120 = vsub.s32 0, %v119
  %v121 = vrot.slane %v116, %v120
  %vm123 = vcmask 261120
  %v125 = vsel %vm123, %v104, 0
  %v128 = vsel %vm123, %v109, 0
  %130 = vmatprep.subr.mxu0 0.0
  %131 = vmatpush1.msra.mxu0 %v112
  %132 = vmatprep.subr.mxu0 0.0
  %133 = vmatpush1.msra.mxu0 %v113
  %134 = vmatprep.subr.mxu0 0.0
  %135 = vmatpush1.msra.mxu0 %v114
  %136 = vmatprep.subr.mxu0 0.0
  %137 = vmatpush1.msra.mxu0 %v115
  %138 = vmatprep.subr.mxu0 0.0
  %139 = vmatpush1.msra.mxu0 0.0
  %140 = vmatprep.subr.mxu0 0.0
  %141 = vmatpush1.msra.mxu0 0.0
  %142 = vmatprep.subr.mxu0 0.0
  %143 = vmatpush1.msra.mxu0 0.0
  %144 = vmatprep.subr.mxu0 0.0
  %145 = vmatpush1.msra.mxu0 0.0
  %146 = vmatprep.subr.mxu0 0.0
  %147 = vmatpush1.msra.mxu0 0.0
  %148 = vmatprep.subr.mxu0 0.0
  %149 = vmatpush1.msra.mxu0 0.0
  %150 = vmatprep.subr.mxu0 0.0
  %151 = vmatpush1.msra.mxu0 0.0
  %152 = vmatprep.subr.mxu0 0.0
  %153 = vmatpush1.msra.mxu0 0.0
  %154 = vmatprep.subr.mxu0 0.0
  %155 = vmatpush1.msra.mxu0 0.0
  %156 = vmatprep.subr.mxu0 0.0
  %157 = vmatpush1.msra.mxu0 0.0
  %158 = vmatprep.subr.mxu0 0.0
  %159 = vmatpush1.msra.mxu0 0.0
  %160 = vmatprep.subr.mxu0 0.0
  %161 = vmatpush1.msra.mxu0 0.0
  %162 = vmatprep.subr.mxu0 0.0
  %163 = vmatpush1.msra.mxu0 0.0
  %164 = vmatprep.subr.mxu0 0.0
  %165 = vmatpush1.msra.mxu0 0.0
  %166 = vmatprep.subr.mxu0 0.0
  %167 = vmatpush1.msra.mxu0 0.0
  %168 = vmatprep.subr.mxu0 0.0
  %169 = vmatpush1.msra.mxu0 0.0
  %170 = vmatprep.subr.mxu0 0.0
  %171 = vmatpush1.msra.mxu0 0.0
  %172 = vmatprep.subr.mxu0 0.0
  %173 = vmatpush1.msra.mxu0 0.0
  %174 = vmatprep.subr.mxu0 0.0
  %175 = vmatpush1.msra.mxu0 0.0
  %176 = vmatprep.subr.mxu0 0.0
  %177 = vmatpush1.msra.mxu0 0.0
  %178 = vmatprep.subr.mxu0 0.0
  %179 = vmatpush1.msra.mxu0 0.0
  %180 = vmatprep.subr.mxu0 0.0
  %181 = vmatpush1.msra.mxu0 0.0
  %182 = vmatprep.subr.mxu0 0.0
  %183 = vmatpush1.msra.mxu0 0.0
  %184 = vmatprep.subr.mxu0 0.0
  %185 = vmatpush1.msra.mxu0 0.0
  %186 = vmatprep.subr.mxu0 0.0
  %187 = vmatpush1.msra.mxu0 0.0
  %188 = vmatprep.subr.mxu0 0.0
  %189 = vmatpush1.msra.mxu0 0.0
  %190 = vmatprep.subr.mxu0 0.0
  %191 = vmatpush1.msra.mxu0 0.0
  %192 = vmatprep.subr.mxu0 0.0
  %193 = vmatpush1.msra.mxu0 0.0
  %194 = vmatprep.mubr.f32.mxu0 0.0
  %195 = vmatmul.mubr.f32.gmra.mrb[0].mxu0 %v125
  %v196 = vpop.f32.mrb[0].mxu0
  %v197 = vadd.f32 %v121, %v196
  %v198 = vpop.f32.mrb[0].mxu0
  %199 = vmatprep.mubr.f32.mxu0 0.0
  %200 = vmatmul.mubr.f32.gmra.mrb[0].mxu0 %v128
  %v201 = vpop.f32.mrb[0].mxu0
  %v202 = vadd.f32 %v121, %v201
  %v203 = vpop.f32.mrb[0].mxu0
  %204 = vdwg.mxu0
  %v205 = vmax.f32 %v197, 0.0
  %v206 = vmax.f32 %v202, 0.0
  %v207 = vld [vmem:[%s4] sm:$0xff]
  %v208 = vld [vmem:[%s4 + $0x8] sm:$0xff]
  %v209 = vld [vmem:[%s4 + $0x10] sm:$0xff]
  %v210 = vld [vmem:[%s4 + $0x18] sm:$0xff]
  %v211 = vld [vmem:[%s4 + $0x20] sm:$0xff]
  %v212 = vld [vmem:[%s4 + $0x28] sm:$0xff]
  %v213 = vld [vmem:[%s4 + $0x30] sm:$0xff]
  %v214 = vld [vmem:[%s4 + $0x38] sm:$0xff]
  %v215 = vld [vmem:[%s4 + $0x40] sm:$0xff]
  %v216 = vld [vmem:[%s4 + $0x48] sm:$0xff]
  %v217 = vld [vmem:[%s4 + $0x50] sm:$0xff]
  %v218 = vld [vmem:[%s4 + $0x58] sm:$0xff]
  %v219 = vld [vmem:[%s4 + $0x60] sm:$0xff]
  %v220 = vld [vmem:[%s4 + $0x68] sm:$0xff]
  %v221 = vld [vmem:[%s4 + $0x70] sm:$0xff]
  %v222 = vld [vmem:[%s4 + $0x78] sm:$0xff]
  %223 = vmatprep.subr.mxu0 0.0
  %224 = vmatpush1.msra.mxu0 %v207
  %225 = vmatprep.subr.mxu0 0.0
  %226 = vmatpush1.msra.mxu0 %v208
  %227 = vmatprep.subr.mxu0 0.0
  %228 = vmatpush1.msra.mxu0 %v209
  %229 = vmatprep.subr.mxu0 0.0
  %230 = vmatpush1.msra.mxu0 %v210
  %231 = vmatprep.subr.mxu0 0.0
  %232 = vmatpush1.msra.mxu0 %v211
  %233 = vmatprep.subr.mxu0 0.0
  %234 = vmatpush1.msra.mxu0 %v212
  %235 = vmatprep.subr.mxu0 0.0
  %236 = vmatpush1.msra.mxu0 %v213
  %237 = vmatprep.subr.mxu0 0.0
  %238 = vmatpush1.msra.mxu0 %v214
  %239 = vmatprep.subr.mxu0 0.0
  %240 = vmatpush1.msra.mxu0 %v215
  %241 = vmatprep.subr.mxu0 0.0
  %242 = vmatpush1.msra.mxu0 %v216
  %243 = vmatprep.subr.mxu0 0.0
  %244 = vmatpush1.msra.mxu0 %v217
  %245 = vmatprep.subr.mxu0 0.0
  %246 = vmatpush1.msra.mxu0 %v218
  %247 = vmatprep.subr.mxu0 0.0
  %248 = vmatpush1.msra.mxu0 %v219
  %249 = vmatprep.subr.mxu0 0.0
  %250 = vmatpush1.msra.mxu0 %v220
  %251 = vmatprep.subr.mxu0 0.0
  %252 = vmatpush1.msra.mxu0 %v221
  %253 = vmatprep.subr.mxu0 0.0
  %254 = vmatpush1.msra.mxu0 %v222
  %255 = vmatprep.subr.mxu0 0.0
  %256 = vmatpush1.msra.mxu0 0.0
  %257 = vmatprep.subr.mxu0 0.0
  %258 = vmatpush1.msra.mxu0 0.0
  %259 = vmatprep.subr.mxu0 0.0
  %260 = vmatpush1.msra.mxu0 0.0
  %261 = vmatprep.subr.mxu0 0.0
  %262 = vmatpush1.msra.mxu0 0.0
  %263 = vmatprep.subr.mxu0 0.0
  %264 = vmatpush1.msra.mxu0 0.0
  %265 = vmatprep.subr.mxu0 0.0
  %266 = vmatpush1.msra.mxu0 0.0
  %267 = vmatprep.subr.mxu0 0.0
  %268 = vmatpush1.msra.mxu0 0.0
  %269 = vmatprep.subr.mxu0 0.0
  %270 = vmatpush1.msra.mxu0 0.0
  %271 = vmatprep.subr.mxu0 0.0
  %272 = vmatpush1.msra.mxu0 0.0
  %273 = vmatprep.subr.mxu0 0.0
  %274 = vmatpush1.msra.mxu0 0.0
  %275 = vmatprep.subr.mxu0 0.0
  %276 = vmatpush1.msra.mxu0 0.0
  %277 = vmatprep.subr.mxu0 0.0
  %278 = vmatpush1.msra.mxu0 0.0
  %279 = vmatprep.subr.mxu0 0.0
  %280 = vmatpush1.msra.mxu0 0.0
  %281 = vmatprep.subr.mxu0 0.0
  %282 = vmatpush1.msra.mxu0 0.0
  %283 = vmatprep.subr.mxu0 0.0
  %284 = vmatpush1.msra.mxu0 0.0
  %285 = vmatprep.subr.mxu0 0.0
  %286 = vmatpush1.msra.mxu0 0.0
  %287 = vmatprep.mubr.f32.mxu0 0.0
  %288 = vmatmul.mubr.f32.gmra.mrb[0].mxu0 %v205
  %v289 = vpop.f32.mrb[0].mxu0
  %v290 = vadd.f32 0.0, %v289
  %v291 = vpop.f32.mrb[0].mxu0
  %292 = vmatprep.mubr.f32.mxu0 0.0
  %293 = vmatmul.mubr.f32.gmra.mrb[0].mxu0 %v206
  %v294 = vpop.f32.mrb[0].mxu0
  %v295 = vadd.f32 0.0, %v294
  %v296 = vpop.f32.mrb[0].mxu0
  %297 = vdwg.mxu0
  %v298 = vld [vmem:[%s5] sm:$0x1]
  %v300 = vlaneseq
  %v301 = vshrl.u32 %v300, 7
  %v302 = vsub.s32 0, %v301
  %v303 = vrot.slane %v298, %v302
  %305 = vmatprep.subr.mxu0 0.0
  %306 = vmatpush1.msra.mxu0 %v290
  %307 = vmatprep.subr.mxu0 0.0
  %308 = vmatpush1.msra.mxu0 %v295
  %309 = vmatprep.subr.mxu0 0.0
  %310 = vmatpush1.msra.mxu0 0.0
  %311 = vmatprep.subr.mxu0 0.0
  %312 = vmatpush1.msra.mxu0 0.0
  %313 = vmatprep.subr.mxu0 0.0
  %314 = vmatpush1.msra.mxu0 0.0
  %315 = vmatprep.subr.mxu0 0.0
  %316 = vmatpush1.msra.mxu0 0.0
  %317 = vmatprep.subr.mxu0 0.0
  %318 = vmatpush1.msra.mxu0 0.0
  %319 = vmatprep.subr.mxu0 0.0
  %320 = vmatpush1.msra.mxu0 0.0
  %321 = vmatprep.subr.mxu0 0.0
  %322 = vmatpush1.msra.mxu0 0.0
  %323 = vmatprep.subr.mxu0 0.0
  %324 = vmatpush1.msra.mxu0 0.0
  %325 = vmatprep.subr.mxu0 0.0
  %326 = vmatpush1.msra.mxu0 0.0
  %327 = vmatprep.subr.mxu0 0.0
  %328 = vmatpush1.msra.mxu0 0.0
  %329 = vmatprep.subr.mxu0 0.0
  %330 = vmatpush1.msra.mxu0 0.0
  %331 = vmatprep.subr.mxu0 0.0
  %332 = vmatpush1.msra.mxu0 0.0
  %333 = vmatprep.subr.mxu0 0.0
  %334 = vmatpush1.msra.mxu0 0.0
  %335 = vmatprep.subr.mxu0 0.0
  %336 = vmatpush1.msra.mxu0 0.0
  %337 = vmatprep.subr.mxu0 0.0
  %338 = vmatpush1.msra.mxu0 0.0
  %339 = vmatprep.subr.mxu0 0.0
  %340 = vmatpush1.msra.mxu0 0.0
  %341 = vmatprep.subr.mxu0 0.0
  %342 = vmatpush1.msra.mxu0 0.0
  %343 = vmatprep.subr.mxu0 0.0
  %344 = vmatpush1.msra.mxu0 0.0
  %345 = vmatprep.subr.mxu0 0.0
  %346 = vmatpush1.msra.mxu0 0.0
  %347 = vmatprep.subr.mxu0 0.0
  %348 = vmatpush1.msra.mxu0 0.0
  %349 = vmatprep.subr.mxu0 0.0
  %350 = vmatpush1.msra.mxu0 0.0
  %351 = vmatprep.subr.mxu0 0.0
  %352 = vmatpush1.msra.mxu0 0.0
  %353 = vmatprep.subr.mxu0 0.0
  %354 = vmatpush1.msra.mxu0 0.0
  %355 = vmatprep.subr.mxu0 0.0
  %356 = vmatpush1.msra.mxu0 0.0
  %357 = vmatprep.subr.mxu0 0.0
  %358 = vmatpush1.msra.mxu0 0.0
  %359 = vmatprep.subr.mxu0 0.0
  %360 = vmatpush1.msra.mxu0 0.0
  %361 = vmatprep.subr.mxu0 0.0
  %362 = vmatpush1.msra.mxu0 0.0
  %363 = vmatprep.subr.mxu0 0.0
  %364 = vmatpush1.msra.mxu0 0.0
  %365 = vmatprep.subr.mxu0 0.0
  %366 = vmatpush1.msra.mxu0 0.0
  %367 = vmatprep.subr.mxu0 0.0
  %368 = vmatpush1.msra.mxu0 0.0
  %369 = vmatprep.mubr.f32.mxu0 0.0
  %370 = vmatmul.mubr.f32.gmra.mrb[0].mxu0 %v32
  %v371 = vpop.f32.mrb[0].mxu0
  %v372 = vadd.f32 %v303, %v371
  %v373 = vpop.f32.mrb[0].mxu0
  %374 = vmatprep.mubr.f32.mxu0 0.0
  %375 = vmatmul.mubr.f32.gmra.mrb[0].mxu0 %v35
  %v376 = vpop.f32.mrb[0].mxu0
  %v377 = vadd.f32 %v303, %v376
  %v378 = vpop.f32.mrb[0].mxu0
  %379 = vdwg.mxu0
  %v380 = vlaneseq
  %v381 = vand.u32 %v380, 127
  %v382 = vld [vmem:[%s6] sm:$0xff]
  %v383 = vld [vmem:[%s6 + $0x8] sm:$0xff]
  %v384 = vld [vmem:[%s6 + $0x10] sm:$0xff]
  %v385 = vld [vmem:[%s6 + $0x18] sm:$0xff]
  %v386 = vld [vmem:[%s6 + $0x20] sm:$0xff]
  %v387 = vld [vmem:[%s6 + $0x28] sm:$0xff]
  %v388 = vld [vmem:[%s6 + $0x30] sm:$0xff]
  %v389 = vld [vmem:[%s6 + $0x38] sm:$0xff]
  %v390 = vld [vmem:[%s6 + $0x40] sm:$0xff]
  %v391 = vld [vmem:[%s6 + $0x48] sm:$0xff]
  %v392 = vld [vmem:[%s6 + $0x50] sm:$0xff]
  %v393 = vld [vmem:[%s6 + $0x58] sm:$0xff]
  %v394 = vld [vmem:[%s6 + $0x60] sm:$0xff]
  %v395 = vld [vmem:[%s6 + $0x68] sm:$0xff]
  %v396 = vld [vmem:[%s6 + $0x70] sm:$0xff]
  %v397 = vld [vmem:[%s6 + $0x78] sm:$0xff]
  %v398 = vld [vmem:[%s6 + $0x80] sm:$0xff]
  %v399 = vld [vmem:[%s6 + $0x88] sm:$0xff]
  %v400 = vld [vmem:[%s6 + $0x90] sm:$0xff]
  %v401 = vld [vmem:[%s6 + $0x98] sm:$0xff]
  %v402 = vld [vmem:[%s6 + $0xa0] sm:$0xff]
  %v403 = vld [vmem:[%s6 + $0xa8] sm:$0xff]
  %v404 = vld [vmem:[%s6 + $0xb0] sm:$0xff]
  %v405 = vld [vmem:[%s6 + $0xb8] sm:$0xff]
  %v406 = vld [vmem:[%s6 + $0xc0] sm:$0xff]
  %v407 = vld [vmem:[%s6 + $0xc8] sm:$0xff]
  %v408 = vld [vmem:[%s6 + $0xd0] sm:$0xff]
  %v409 = vld [vmem:[%s6 + $0xd8] sm:$0xff]
  %v410 = vld [vmem:[%s6 + $0xe0] sm:$0xff]
  %v411 = vld [vmem:[%s6 + $0xe8] sm:$0xff]
  %v412 = vld [vmem:[%s6 + $0xf0] sm:$0xff]
  %v413 = vld [vmem:[%s6 + $0xf8] sm:$0xff]
  %414 = vset.pattern.permute.xlu0 0
  %415 = vperm.xlu0 %414, %v382
  %v416 = vpop.permute.xlu0 %415
  %417 = vset.pattern.permute.xlu0 0
  %418 = vperm.xlu0 %417, %v383
  %v419 = vpop.permute.xlu0 %418
  %420 = vset.pattern.permute.xlu0 0
  %421 = vperm.xlu0 %420, %v384
  %v422 = vpop.permute.xlu0 %421
  %423 = vset.pattern.permute.xlu0 0
  %424 = vperm.xlu0 %423, %v385
  %v425 = vpop.permute.xlu0 %424
  %426 = vset.pattern.permute.xlu0 0
  %427 = vperm.xlu0 %426, %v386
  %v428 = vpop.permute.xlu0 %427
  %429 = vset.pattern.permute.xlu0 0
  %430 = vperm.xlu0 %429, %v387
  %v431 = vpop.permute.xlu0 %430
  %432 = vset.pattern.permute.xlu0 0
  %433 = vperm.xlu0 %432, %v388
  %v434 = vpop.permute.xlu0 %433
  %435 = vset.pattern.permute.xlu0 0
  %436 = vperm.xlu0 %435, %v389
  %v437 = vpop.permute.xlu0 %436
  %438 = vset.pattern.permute.xlu0 0
  %439 = vperm.xlu0 %438, %v390
  %v440 = vpop.permute.xlu0 %439
  %441 = vset.pattern.permute.xlu0 0
  %442 = vperm.xlu0 %441, %v391
  %v443 = vpop.permute.xlu0 %442
  %444 = vset.pattern.permute.xlu0 0
  %445 = vperm.xlu0 %444, %v392
  %v446 = vpop.permute.xlu0 %445
  %447 = vset.pattern.permute.xlu0 0
  %448 = vperm.xlu0 %447, %v393
  %v449 = vpop.permute.xlu0 %448
  %450 = vset.pattern.permute.xlu0 0
  %451 = vperm.xlu0 %450, %v394
  %v452 = vpop.permute.xlu0 %451
  %453 = vset.pattern.permute.xlu0 0
  %454 = vperm.xlu0 %453, %v395
  %v455 = vpop.permute.xlu0 %454
  %456 = vset.pattern.permute.xlu0 0
  %457 = vperm.xlu0 %456, %v396
  %v458 = vpop.permute.xlu0 %457
  %459 = vset.pattern.permute.xlu0 0
  %460 = vperm.xlu0 %459, %v397
  %v461 = vpop.permute.xlu0 %460
  %462 = vset.pattern.permute.xlu0 0
  %463 = vperm.xlu0 %462, %v398
  %v464 = vpop.permute.xlu0 %463
  %465 = vset.pattern.permute.xlu0 0
  %466 = vperm.xlu0 %465, %v399
  %v467 = vpop.permute.xlu0 %466
  %468 = vset.pattern.permute.xlu0 0
  %469 = vperm.xlu0 %468, %v400
  %v470 = vpop.permute.xlu0 %469
  %471 = vset.pattern.permute.xlu0 0
  %472 = vperm.xlu0 %471, %v401
  %v473 = vpop.permute.xlu0 %472
  %474 = vset.pattern.permute.xlu0 0
  %475 = vperm.xlu0 %474, %v402
  %v476 = vpop.permute.xlu0 %475
  %477 = vset.pattern.permute.xlu0 0
  %478 = vperm.xlu0 %477, %v403
  %v479 = vpop.permute.xlu0 %478
  %480 = vset.pattern.permute.xlu0 0
  %481 = vperm.xlu0 %480, %v404
  %v482 = vpop.permute.xlu0 %481
  %483 = vset.pattern.permute.xlu0 0
  %484 = vperm.xlu0 %483, %v405
  %v485 = vpop.permute.xlu0 %484
  %486 = vset.pattern.permute.xlu0 0
  %487 = vperm.xlu0 %486, %v406
  %v488 = vpop.permute.xlu0 %487
  %489 = vset.pattern.permute.xlu0 0
  %490 = vperm.xlu0 %489, %v407
  %v491 = vpop.permute.xlu0 %490
  %492 = vset.pattern.permute.xlu0 0
  %493 = vperm.xlu0 %492, %v408
  %v494 = vpop.permute.xlu0 %493
  %495 = vset.pattern.permute.xlu0 0
  %496 = vperm.xlu0 %495, %v409
  %v497 = vpop.permute.xlu0 %496
  %498 = vset.pattern.permute.xlu0 0
  %499 = vperm.xlu0 %498, %v410
  %v500 = vpop.permute.xlu0 %499
  %501 = vset.pattern.permute.xlu0 0
  %502 = vperm.xlu0 %501, %v411
  %v503 = vpop.permute.xlu0 %502
  %504 = vset.pattern.permute.xlu0 0
  %505 = vperm.xlu0 %504, %v412
  %v506 = vpop.permute.xlu0 %505
  %507 = vset.pattern.permute.xlu0 0
  %508 = vperm.xlu0 %507, %v413
  %v509 = vpop.permute.xlu0 %508
  %vm510 = vcmp.eq.s32.totalorder %v381, %v416
  %vm511 = vcmp.eq.s32.totalorder %v381, %v419
  %vm512 = vcmp.eq.s32.totalorder %v381, %v422
  %vm513 = vcmp.eq.s32.totalorder %v381, %v425
  %vm514 = vcmp.eq.s32.totalorder %v381, %v428
  %vm515 = vcmp.eq.s32.totalorder %v381, %v431
  %vm516 = vcmp.eq.s32.totalorder %v381, %v434
  %vm517 = vcmp.eq.s32.totalorder %v381, %v437
  %vm518 = vcmp.eq.s32.totalorder %v381, %v440
  %vm519 = vcmp.eq.s32.totalorder %v381, %v443
  %vm520 = vcmp.eq.s32.totalorder %v381, %v446
  %vm521 = vcmp.eq.s32.totalorder %v381, %v449
  %vm522 = vcmp.eq.s32.totalorder %v381, %v452
  %vm523 = vcmp.eq.s32.totalorder %v381, %v455
  %vm524 = vcmp.eq.s32.totalorder %v381, %v458
  %vm525 = vcmp.eq.s32.totalorder %v381, %v461
  %vm526 = vcmp.eq.s32.totalorder %v381, %v464
  %vm527 = vcmp.eq.s32.totalorder %v381, %v467
  %vm528 = vcmp.eq.s32.totalorder %v381, %v470
  %vm529 = vcmp.eq.s32.totalorder %v381, %v473
  %vm530 = vcmp.eq.s32.totalorder %v381, %v476
  %vm531 = vcmp.eq.s32.totalorder %v381, %v479
  %vm532 = vcmp.eq.s32.totalorder %v381, %v482
  %vm533 = vcmp.eq.s32.totalorder %v381, %v485
  %vm534 = vcmp.eq.s32.totalorder %v381, %v488
  %vm535 = vcmp.eq.s32.totalorder %v381, %v491
  %vm536 = vcmp.eq.s32.totalorder %v381, %v494
  %vm537 = vcmp.eq.s32.totalorder %v381, %v497
  %vm538 = vcmp.eq.s32.totalorder %v381, %v500
  %vm539 = vcmp.eq.s32.totalorder %v381, %v503
  %vm540 = vcmp.eq.s32.totalorder %v381, %v506
  %vm541 = vcmp.eq.s32.totalorder %v381, %v509
  %v542 = vsel %vm510, 1, 0
  %v543 = vsel %vm511, 1, 0
  %v544 = vsel %vm512, 1, 0
  %v545 = vsel %vm513, 1, 0
  %v546 = vsel %vm514, 1, 0
  %v547 = vsel %vm515, 1, 0
  %v548 = vsel %vm516, 1, 0
  %v549 = vsel %vm517, 1, 0
  %v550 = vsel %vm518, 1, 0
  %v551 = vsel %vm519, 1, 0
  %v552 = vsel %vm520, 1, 0
  %v553 = vsel %vm521, 1, 0
  %v554 = vsel %vm522, 1, 0
  %v555 = vsel %vm523, 1, 0
  %v556 = vsel %vm524, 1, 0
  %v557 = vsel %vm525, 1, 0
  %v558 = vsel %vm526, 1, 0
  %v559 = vsel %vm527, 1, 0
  %v560 = vsel %vm528, 1, 0
  %v561 = vsel %vm529, 1, 0
  %v562 = vsel %vm530, 1, 0
  %v563 = vsel %vm531, 1, 0
  %v564 = vsel %vm532, 1, 0
  %v565 = vsel %vm533, 1, 0
  %v566 = vsel %vm534, 1, 0
  %v567 = vsel %vm535, 1, 0
  %v568 = vsel %vm536, 1, 0
  %v569 = vsel %vm537, 1, 0
  %v570 = vsel %vm538, 1, 0
  %v571 = vsel %vm539, 1, 0
  %v572 = vsel %vm540, 1, 0
  %v573 = vsel %vm541, 1, 0
  %v574 = vcvt.s32.f32 %v542
  %v575 = vcvt.s32.f32 %v543
  %v576 = vcvt.s32.f32 %v544
  %v577 = vcvt.s32.f32 %v545
  %v578 = vcvt.s32.f32 %v546
  %v579 = vcvt.s32.f32 %v547
  %v580 = vcvt.s32.f32 %v548
  %v581 = vcvt.s32.f32 %v549
  %v582 = vcvt.s32.f32 %v550
  %v583 = vcvt.s32.f32 %v551
  %v584 = vcvt.s32.f32 %v552
  %v585 = vcvt.s32.f32 %v553
  %v586 = vcvt.s32.f32 %v554
  %v587 = vcvt.s32.f32 %v555
  %v588 = vcvt.s32.f32 %v556
  %v589 = vcvt.s32.f32 %v557
  %v590 = vcvt.s32.f32 %v558
  %v591 = vcvt.s32.f32 %v559
  %v592 = vcvt.s32.f32 %v560
  %v593 = vcvt.s32.f32 %v561
  %v594 = vcvt.s32.f32 %v562
  %v595 = vcvt.s32.f32 %v563
  %v596 = vcvt.s32.f32 %v564
  %v597 = vcvt.s32.f32 %v565
  %v598 = vcvt.s32.f32 %v566
  %v599 = vcvt.s32.f32 %v567
  %v600 = vcvt.s32.f32 %v568
  %v601 = vcvt.s32.f32 %v569
  %v602 = vcvt.s32.f32 %v570
  %v603 = vcvt.s32.f32 %v571
  %v604 = vcvt.s32.f32 %v572
  %v605 = vcvt.s32.f32 %v573
  %v607 = vsel %vm30, %v574, 0
  %v610 = vsel %vm30, %v575, 0
  %v613 = vsel %vm30, %v576, 0
  %v616 = vsel %vm30, %v577, 0
  %v619 = vsel %vm30, %v578, 0
  %v622 = vsel %vm30, %v579, 0
  %v625 = vsel %vm30, %v580, 0
  %v628 = vsel %vm30, %v581, 0
  %v631 = vsel %vm30, %v582, 0
  %v634 = vsel %vm30, %v583, 0
  %v637 = vsel %vm30, %v584, 0
  %v640 = vsel %vm30, %v585, 0
  %v643 = vsel %vm30, %v586, 0
  %v646 = vsel %vm30, %v587, 0
  %v649 = vsel %vm30, %v588, 0
  %v652 = vsel %vm30, %v589, 0
  %v655 = vsel %vm30, %v590, 0
  %v658 = vsel %vm30, %v591, 0
  %v661 = vsel %vm30, %v592, 0
  %v664 = vsel %vm30, %v593, 0
  %v667 = vsel %vm30, %v594, 0
  %v670 = vsel %vm30, %v595, 0
  %v673 = vsel %vm30, %v596, 0
  %v676 = vsel %vm30, %v597, 0
  %v679 = vsel %vm30, %v598, 0
  %v682 = vsel %vm30, %v599, 0
  %v685 = vsel %vm30, %v600, 0
  %v688 = vsel %vm30, %v601, 0
  %v691 = vsel %vm30, %v602, 0
  %v694 = vsel %vm30, %v603, 0
  %v697 = vsel %vm30, %v604, 0
  %v700 = vsel %vm30, %v605, 0
  %702 = vmatprep.subr.mxu0 0.0
  %703 = vmatpush1.msra.mxu0 %v372
  %704 = vmatprep.subr.mxu0 0.0
  %705 = vmatpush1.msra.mxu0 %v377
  %706 = vmatprep.subr.mxu0 0.0
  %707 = vmatpush1.msra.mxu0 0.0
  %708 = vmatprep.subr.mxu0 0.0
  %709 = vmatpush1.msra.mxu0 0.0
  %710 = vmatprep.subr.mxu0 0.0
  %711 = vmatpush1.msra.mxu0 0.0
  %712 = vmatprep.subr.mxu0 0.0
  %713 = vmatpush1.msra.mxu0 0.0
  %714 = vmatprep.subr.mxu0 0.0
  %715 = vmatpush1.msra.mxu0 0.0
  %716 = vmatprep.subr.mxu0 0.0
  %717 = vmatpush1.msra.mxu0 0.0
  %718 = vmatprep.subr.mxu0 0.0
  %719 = vmatpush1.msra.mxu0 0.0
  %720 = vmatprep.subr.mxu0 0.0
  %721 = vmatpush1.msra.mxu0 0.0
  %722 = vmatprep.subr.mxu0 0.0
  %723 = vmatpush1.msra.mxu0 0.0
  %724 = vmatprep.subr.mxu0 0.0
  %725 = vmatpush1.msra.mxu0 0.0
  %726 = vmatprep.subr.mxu0 0.0
  %727 = vmatpush1.msra.mxu0 0.0
  %728 = vmatprep.subr.mxu0 0.0
  %729 = vmatpush1.msra.mxu0 0.0
  %730 = vmatprep.subr.mxu0 0.0
  %731 = vmatpush1.msra.mxu0 0.0
  %732 = vmatprep.subr.mxu0 0.0
  %733 = vmatpush1.msra.mxu0 0.0
  %734 = vmatprep.subr.mxu0 0.0
  %735 = vmatpush1.msra.mxu0 0.0
  %736 = vmatprep.subr.mxu0 0.0
  %737 = vmatpush1.msra.mxu0 0.0
  %738 = vmatprep.subr.mxu0 0.0
  %739 = vmatpush1.msra.mxu0 0.0
  %740 = vmatprep.subr.mxu0 0.0
  %741 = vmatpush1.msra.mxu0 0.0
  %742 = vmatprep.subr.mxu0 0.0
  %743 = vmatpush1.msra.mxu0 0.0
  %744 = vmatprep.subr.mxu0 0.0
  %745 = vmatpush1.msra.mxu0 0.0
  %746 = vmatprep.subr.mxu0 0.0
  %747 = vmatpush1.msra.mxu0 0.0
  %748 = vmatprep.subr.mxu0 0.0
  %749 = vmatpush1.msra.mxu0 0.0
  %750 = vmatprep.subr.mxu0 0.0
  %751 = vmatpush1.msra.mxu0 0.0
  %752 = vmatprep.subr.mxu0 0.0
  %753 = vmatpush1.msra.mxu0 0.0
  %754 = vmatprep.subr.mxu0 0.0
  %755 = vmatpush1.msra.mxu0 0.0
  %756 = vmatprep.subr.mxu0 0.0
  %757 = vmatpush1.msra.mxu0 0.0
  %758 = vmatprep.subr.mxu0 0.0
  %759 = vmatpush1.msra.mxu0 0.0
  %760 = vmatprep.subr.mxu0 0.0
  %761 = vmatpush1.msra.mxu0 0.0
  %762 = vmatprep.subr.mxu0 0.0
  %763 = vmatpush1.msra.mxu0 0.0
  %764 = vmatprep.subr.mxu0 0.0
  %765 = vmatpush1.msra.mxu0 0.0
  %766 = vmatprep.mubr.f32.mxu0 0.0
  %767 = vmatmul.mubr.f32.gmra.mrb[0].mxu0 %v607
  %v768 = vpop.f32.mrb[0].mxu0
  %v769 = vadd.f32 0.0, %v768
  %v770 = vpop.f32.mrb[0].mxu0
  %771 = vmatprep.mubr.f32.mxu0 0.0
  %772 = vmatmul.mubr.f32.gmra.mrb[0].mxu0 %v610
  %v773 = vpop.f32.mrb[0].mxu0
  %v774 = vadd.f32 0.0, %v773
  %v775 = vpop.f32.mrb[0].mxu0
  %776 = vmatprep.mubr.f32.mxu0 0.0
  %777 = vmatmul.mubr.f32.gmra.mrb[0].mxu0 %v613
  %v778 = vpop.f32.mrb[0].mxu0
  %v779 = vadd.f32 0.0, %v778
  %v780 = vpop.f32.mrb[0].mxu0
  %781 = vmatprep.mubr.f32.mxu0 0.0
  %782 = vmatmul.mubr.f32.gmra.mrb[0].mxu0 %v616
  %v783 = vpop.f32.mrb[0].mxu0
  %v784 = vadd.f32 0.0, %v783
  %v785 = vpop.f32.mrb[0].mxu0
  %786 = vmatprep.mubr.f32.mxu0 0.0
  %787 = vmatmul.mubr.f32.gmra.mrb[0].mxu0 %v619
  %v788 = vpop.f32.mrb[0].mxu0
  %v789 = vadd.f32 0.0, %v788
  %v790 = vpop.f32.mrb[0].mxu0
  %791 = vmatprep.mubr.f32.mxu0 0.0
  %792 = vmatmul.mubr.f32.gmra.mrb[0].mxu0 %v622
  %v793 = vpop.f32.mrb[0].mxu0
  %v794 = vadd.f32 0.0, %v793
  %v795 = vpop.f32.mrb[0].mxu0
  %796 = vmatprep.mubr.f32.mxu0 0.0
  %797 = vmatmul.mubr.f32.gmra.mrb[0].mxu0 %v625
  %v798 = vpop.f32.mrb[0].mxu0
  %v799 = vadd.f32 0.0, %v798
  %v800 = vpop.f32.mrb[0].mxu0
  %801 = vmatprep.mubr.f32.mxu0 0.0
  %802 = vmatmul.mubr.f32.gmra.mrb[0].mxu0 %v628
  %v803 = vpop.f32.mrb[0].mxu0
  %v804 = vadd.f32 0.0, %v803
  %v805 = vpop.f32.mrb[0].mxu0
  %806 = vmatprep.mubr.f32.mxu0 0.0
  %807 = vmatmul.mubr.f32.gmra.mrb[0].mxu0 %v631
  %v808 = vpop.f32.mrb[0].mxu0
  %v809 = vadd.f32 0.0, %v808
  %v810 = vpop.f32.mrb[0].mxu0
  %811 = vmatprep.mubr.f32.mxu0 0.0
  %812 = vmatmul.mubr.f32.gmra.mrb[0].mxu0 %v634
  %v813 = vpop.f32.mrb[0].mxu0
  %v814 = vadd.f32 0.0, %v813
  %v815 = vpop.f32.mrb[0].mxu0
  %816 = vmatprep.mubr.f32.mxu0 0.0
  %817 = vmatmul.mubr.f32.gmra.mrb[0].mxu0 %v637
  %v818 = vpop.f32.mrb[0].mxu0
  %v819 = vadd.f32 0.0, %v818
  %v820 = vpop.f32.mrb[0].mxu0
  %821 = vmatprep.mubr.f32.mxu0 0.0
  %822 = vmatmul.mubr.f32.gmra.mrb[0].mxu0 %v640
  %v823 = vpop.f32.mrb[0].mxu0
  %v824 = vadd.f32 0.0, %v823
  %v825 = vpop.f32.mrb[0].mxu0
  %826 = vmatprep.mubr.f32.mxu0 0.0
  %827 = vmatmul.mubr.f32.gmra.mrb[0].mxu0 %v643
  %v828 = vpop.f32.mrb[0].mxu0
  %v829 = vadd.f32 0.0, %v828
  %v830 = vpop.f32.mrb[0].mxu0
  %831 = vmatprep.mubr.f32.mxu0 0.0
  %832 = vmatmul.mubr.f32.gmra.mrb[0].mxu0 %v646
  %v833 = vpop.f32.mrb[0].mxu0
  %v834 = vadd.f32 0.0, %v833
  %v835 = vpop.f32.mrb[0].mxu0
  %836 = vmatprep.mubr.f32.mxu0 0.0
  %837 = vmatmul.mubr.f32.gmra.mrb[0].mxu0 %v649
  %v838 = vpop.f32.mrb[0].mxu0
  %v839 = vadd.f32 0.0, %v838
  %v840 = vpop.f32.mrb[0].mxu0
  %841 = vmatprep.mubr.f32.mxu0 0.0
  %842 = vmatmul.mubr.f32.gmra.mrb[0].mxu0 %v652
  %v843 = vpop.f32.mrb[0].mxu0
  %v844 = vadd.f32 0.0, %v843
  %v845 = vpop.f32.mrb[0].mxu0
  %846 = vmatprep.mubr.f32.mxu0 0.0
  %847 = vmatmul.mubr.f32.gmra.mrb[0].mxu0 %v655
  %v848 = vpop.f32.mrb[0].mxu0
  %v849 = vadd.f32 0.0, %v848
  %v850 = vpop.f32.mrb[0].mxu0
  %851 = vmatprep.mubr.f32.mxu0 0.0
  %852 = vmatmul.mubr.f32.gmra.mrb[0].mxu0 %v658
  %v853 = vpop.f32.mrb[0].mxu0
  %v854 = vadd.f32 0.0, %v853
  %v855 = vpop.f32.mrb[0].mxu0
  %856 = vmatprep.mubr.f32.mxu0 0.0
  %857 = vmatmul.mubr.f32.gmra.mrb[0].mxu0 %v661
  %v858 = vpop.f32.mrb[0].mxu0
  %v859 = vadd.f32 0.0, %v858
  %v860 = vpop.f32.mrb[0].mxu0
  %861 = vmatprep.mubr.f32.mxu0 0.0
  %862 = vmatmul.mubr.f32.gmra.mrb[0].mxu0 %v664
  %v863 = vpop.f32.mrb[0].mxu0
  %v864 = vadd.f32 0.0, %v863
  %v865 = vpop.f32.mrb[0].mxu0
  %866 = vmatprep.mubr.f32.mxu0 0.0
  %867 = vmatmul.mubr.f32.gmra.mrb[0].mxu0 %v667
  %v868 = vpop.f32.mrb[0].mxu0
  %v869 = vadd.f32 0.0, %v868
  %v870 = vpop.f32.mrb[0].mxu0
  %871 = vmatprep.mubr.f32.mxu0 0.0
  %872 = vmatmul.mubr.f32.gmra.mrb[0].mxu0 %v670
  %v873 = vpop.f32.mrb[0].mxu0
  %v874 = vadd.f32 0.0, %v873
  %v875 = vpop.f32.mrb[0].mxu0
  %876 = vmatprep.mubr.f32.mxu0 0.0
  %877 = vmatmul.mubr.f32.gmra.mrb[0].mxu0 %v673
  %v878 = vpop.f32.mrb[0].mxu0
  %v879 = vadd.f32 0.0, %v878
  %v880 = vpop.f32.mrb[0].mxu0
  %881 = vmatprep.mubr.f32.mxu0 0.0
  %882 = vmatmul.mubr.f32.gmra.mrb[0].mxu0 %v676
  %v883 = vpop.f32.mrb[0].mxu0
  %v884 = vadd.f32 0.0, %v883
  %v885 = vpop.f32.mrb[0].mxu0
  %886 = vmatprep.mubr.f32.mxu0 0.0
  %887 = vmatmul.mubr.f32.gmra.mrb[0].mxu0 %v679
  %v888 = vpop.f32.mrb[0].mxu0
  %v889 = vadd.f32 0.0, %v888
  %v890 = vpop.f32.mrb[0].mxu0
  %891 = vmatprep.mubr.f32.mxu0 0.0
  %892 = vmatmul.mubr.f32.gmra.mrb[0].mxu0 %v682
  %v893 = vpop.f32.mrb[0].mxu0
  %v894 = vadd.f32 0.0, %v893
  %v895 = vpop.f32.mrb[0].mxu0
  %896 = vmatprep.mubr.f32.mxu0 0.0
  %897 = vmatmul.mubr.f32.gmra.mrb[0].mxu0 %v685
  %v898 = vpop.f32.mrb[0].mxu0
  %v899 = vadd.f32 0.0, %v898
  %v900 = vpop.f32.mrb[0].mxu0
  %901 = vmatprep.mubr.f32.mxu0 0.0
  %902 = vmatmul.mubr.f32.gmra.mrb[0].mxu0 %v688
  %v903 = vpop.f32.mrb[0].mxu0
  %v904 = vadd.f32 0.0, %v903
  %v905 = vpop.f32.mrb[0].mxu0
  %906 = vmatprep.mubr.f32.mxu0 0.0
  %907 = vmatmul.mubr.f32.gmra.mrb[0].mxu0 %v691
  %v908 = vpop.f32.mrb[0].mxu0
  %v909 = vadd.f32 0.0, %v908
  %v910 = vpop.f32.mrb[0].mxu0
  %911 = vmatprep.mubr.f32.mxu0 0.0
  %912 = vmatmul.mubr.f32.gmra.mrb[0].mxu0 %v694
  %v913 = vpop.f32.mrb[0].mxu0
  %v914 = vadd.f32 0.0, %v913
  %v915 = vpop.f32.mrb[0].mxu0
  %916 = vmatprep.mubr.f32.mxu0 0.0
  %917 = vmatmul.mubr.f32.gmra.mrb[0].mxu0 %v697
  %v918 = vpop.f32.mrb[0].mxu0
  %v919 = vadd.f32 0.0, %v918
  %v920 = vpop.f32.mrb[0].mxu0
  %921 = vmatprep.mubr.f32.mxu0 0.0
  %922 = vmatmul.mubr.f32.gmra.mrb[0].mxu0 %v700
  %v923 = vpop.f32.mrb[0].mxu0
  %v924 = vadd.f32 0.0, %v923
  %v925 = vpop.f32.mrb[0].mxu0
  %926 = vdwg.mxu0
  %v927 = vmul.f32 %v769, %v849
  %v928 = vmul.f32 %v774, %v854
  %v929 = vmul.f32 %v779, %v859
  %v930 = vmul.f32 %v784, %v864
  %v931 = vmul.f32 %v789, %v869
  %v932 = vmul.f32 %v794, %v874
  %v933 = vmul.f32 %v799, %v879
  %v934 = vmul.f32 %v804, %v884
  %v935 = vmul.f32 %v809, %v889
  %v936 = vmul.f32 %v814, %v894
  %v937 = vmul.f32 %v819, %v899
  %v938 = vmul.f32 %v824, %v904
  %v939 = vmul.f32 %v829, %v909
  %v940 = vmul.f32 %v834, %v914
  %v941 = vmul.f32 %v839, %v919
  %v942 = vmul.f32 %v844, %v924
  %vm943 = vcmask 523264
  %v945 = vsel %vm943, 1.0, 0
  %v948 = vsel %vm943, %v927, 0
  %v951 = vsel %vm943, %v928, 0
  %v954 = vsel %vm943, %v929, 0
  %v957 = vsel %vm943, %v930, 0
  %v960 = vsel %vm943, %v931, 0
  %v963 = vsel %vm943, %v932, 0
  %v966 = vsel %vm943, %v933, 0
  %v969 = vsel %vm943, %v934, 0
  %v972 = vsel %vm943, %v935, 0
  %v975 = vsel %vm943, %v936, 0
  %v978 = vsel %vm943, %v937, 0
  %v981 = vsel %vm943, %v938, 0
  %v984 = vsel %vm943, %v939, 0
  %v987 = vsel %vm943, %v940, 0
  %v990 = vsel %vm943, %v941, 0
  %v993 = vsel %vm943, %v942, 0
  %995 = vmatprep.subr.mxu0 0.0
  %996 = vmatpush1.xpose.msra.mxu0 %v948
  %997 = vmatprep.subr.mxu0 0.0
  %998 = vmatpush1.xpose.msra.mxu0 %v951
  %999 = vmatprep.subr.mxu0 0.0
  %1000 = vmatpush1.xpose.msra.mxu0 %v954
  %1001 = vmatprep.subr.mxu0 0.0
  %1002 = vmatpush1.xpose.msra.mxu0 %v957
  %1003 = vmatprep.subr.mxu0 0.0
  %1004 = vmatpush1.xpose.msra.mxu0 %v960
  %1005 = vmatprep.subr.mxu0 0.0
  %1006 = vmatpush1.xpose.msra.mxu0 %v963
  %1007 = vmatprep.subr.mxu0 0.0
  %1008 = vmatpush1.xpose.msra.mxu0 %v966
  %1009 = vmatprep.subr.mxu0 0.0
  %1010 = vmatpush1.xpose.msra.mxu0 %v969
  %1011 = vmatprep.subr.mxu0 0.0
  %1012 = vmatpush1.xpose.msra.mxu0 %v972
  %1013 = vmatprep.subr.mxu0 0.0
  %1014 = vmatpush1.xpose.msra.mxu0 %v975
  %1015 = vmatprep.subr.mxu0 0.0
  %1016 = vmatpush1.xpose.msra.mxu0 %v978
  %1017 = vmatprep.subr.mxu0 0.0
  %1018 = vmatpush1.xpose.msra.mxu0 %v981
  %1019 = vmatprep.subr.mxu0 0.0
  %1020 = vmatpush1.xpose.msra.mxu0 %v984
  %1021 = vmatprep.subr.mxu0 0.0
  %1022 = vmatpush1.xpose.msra.mxu0 %v987
  %1023 = vmatprep.subr.mxu0 0.0
  %1024 = vmatpush1.xpose.msra.mxu0 %v990
  %1025 = vmatprep.subr.mxu0 0.0
  %1026 = vmatpush1.xpose.msra.mxu0 %v993
  %1027 = vmatprep.subr.mxu0 0.0
  %1028 = vmatpush1.xpose.msra.mxu0 0.0
  %1029 = vmatprep.subr.mxu0 0.0
  %1030 = vmatpush1.xpose.msra.mxu0 0.0
  %1031 = vmatprep.subr.mxu0 0.0
  %1032 = vmatpush1.xpose.msra.mxu0 0.0
  %1033 = vmatprep.subr.mxu0 0.0
  %1034 = vmatpush1.xpose.msra.mxu0 0.0
  %1035 = vmatprep.subr.mxu0 0.0
  %1036 = vmatpush1.xpose.msra.mxu0 0.0
  %1037 = vmatprep.subr.mxu0 0.0
  %1038 = vmatpush1.xpose.msra.mxu0 0.0
  %1039 = vmatprep.subr.mxu0 0.0
  %1040 = vmatpush1.xpose.msra.mxu0 0.0
  %1041 = vmatprep.subr.mxu0 0.0
  %1042 = vmatpush1.xpose.msra.mxu0 0.0
  %1043 = vmatprep.subr.mxu0 0.0
  %1044 = vmatpush1.xpose.msra.mxu0 0.0
  %1045 = vmatprep.subr.mxu0 0.0
  %1046 = vmatpush1.xpose.msra.mxu0 0.0
  %1047 = vmatprep.subr.mxu0 0.0
  %1048 = vmatpush1.xpose.msra.mxu0 0.0
  %1049 = vmatprep.subr.mxu0 0.0
  %1050 = vmatpush1.xpose.msra.mxu0 0.0
  %1051 = vmatprep.subr.mxu0 0.0
  %1052 = vmatpush1.xpose.msra.mxu0 0.0
  %1053 = vmatprep.subr.mxu0 0.0
  %1054 = vmatpush1.xpose.msra.mxu0 0.0
  %1055 = vmatprep.subr.mxu0 0.0
  %1056 = vmatpush1.xpose.msra.mxu0 0.0
  %1057 = vmatprep.subr.mxu0 0.0
  %1058 = vmatpush1.xpose.msra.mxu0 0.0
  %1059 = vmatprep.mubr.f32.mxu0 0.0
  %1060 = vmatmul.mubr.f32.gmra.mrb[0].mxu0 %v945
  %v1061 = vpop.f32.mrb[0].mxu0
  %v1062 = vadd.f32 0.0, %v1061
  %v1063 = vpop.f32.mrb[0].mxu0
  %1064 = vdwg.mxu0
  %1065 = vst [vmem:[%s7] sm:$0x1] %v1062
  // Predicated region
  $region30: #{_model_forward_impl.1} parent=0 // pred_check
    _
  $region31: #{_model_forward_impl.1} parent=0 // pred_check_branch
    %1067 = sbr.rel (0) target = $region33
  $region32: #{_model_forward_impl.1} parent=0 // pred_region
    _
  $region33: #{_model_forward_impl.1} parent=0 // pred_fallthru
    _
  // Predicated region
  $region34: #{_model_forward_impl.1} parent=0 // pred_check
    _
  $region35: #{_model_forward_impl.1} parent=0 // pred_check_branch
    %1069 = sbr.rel (0) target = $region37
  $region36: #{_model_forward_impl.1} parent=0 // pred_region
    _
  $region37: #{_model_forward_impl.1} parent=0 // pred_fallthru
    _

</llo_original>
